<compile_context>
chip_gen: v7x
topology: tpu7x:2x2x1
jax: 0.10.0
libtpu: 0.0.40
codegen_flags: <defaults>
</compile_context>

<pallas_src>
import functools

import jax
import jax.numpy as jnp
from jax.experimental import pallas as pl
from jax.experimental.pallas import tpu as pltpu


# ------------------------------ Pallas kernel -------------------------------

def _mf_kernel(u_idx_ref, i_idx_ref, u_tbl_ref, i_tbl_ref, o_ref, *, batch):
    """Fused MF_layer forward.

    out[b, :] = uEmbd[userIdx[b], :] * iEmbd[itemIdx[b], :]

    u_idx_ref / i_idx_ref : SMEM int32[batch]   (scalar prefetch)
    u_tbl_ref             : VMEM f32[num_users, dim]   (full table resident)
    i_tbl_ref             : VMEM f32[num_items, dim]
    o_ref                 : VMEM f32[batch, dim]
    """
    rows = []
    for b in range(batch):  # static, tiny trip count -> fully unrolled
        u_row = u_tbl_ref[pl.ds(u_idx_ref[b], 1), :]   # [1, dim] dynamic row gather
        i_row = i_tbl_ref[pl.ds(i_idx_ref[b], 1), :]   # [1, dim]
        rows.append(u_row * i_row)
    # Single lane-dense [batch, dim] store (one full vreg at B=8, dim=128).
    o_ref[...] = jnp.concatenate(rows, axis=0).astype(o_ref.dtype)


# ------------------------------ Pallas wrapper -------------------------------

def mf_layer_forward(u_table, i_table, user_idx, item_idx):
    """MF_layer.forward: gather user/item embeddings and multiply elementwise.

    u_table : [num_users, dim] f32
    i_table : [num_items, dim] f32
    user_idx, item_idx : [batch] int32
    returns : [batch, dim] f32
    """
    batch = user_idx.shape[0]
    num_users, dim = u_table.shape
    num_items, _ = i_table.shape

    grid_spec = pltpu.PrefetchScalarGridSpec(
        num_scalar_prefetch=2,          # user_idx, item_idx -> SMEM
        grid=(1,),                      # single fused invocation
        in_specs=[
            # Full-array blocks: tables are small and stay VMEM-resident.
            pl.BlockSpec((num_users, dim), lambda g, uids, iids: (0, 0)),
            pl.BlockSpec((num_items, dim), lambda g, uids, iids: (0, 0)),
        ],
        out_specs=pl.BlockSpec((batch, dim), lambda g, uids, iids: (0, 0)),
    )

    return pl.pallas_call(
        functools.partial(_mf_kernel, batch=batch),
        out_shape=jax.ShapeDtypeStruct((batch, dim), u_table.dtype),
        grid_spec=grid_spec,
    )(user_idx, item_idx, u_table, i_table)


# ---------------------------------- Main -------------------------------------

if __name__ == "__main__":
    USER_NUM = 48
    ITEM_NUM = 80
    DIM = 128          # lane-dense embedding dim (multiple of 128)
    BATCH = 8

    root = jax.random.PRNGKey(0)
    k_u, k_i, k_ui, k_ii = jax.random.split(root, 4)

    # nn.Embedding default init ~ N(0, 1)
    u_table = jax.random.normal(k_u, (USER_NUM, DIM), jnp.float32)
    i_table = jax.random.normal(k_i, (ITEM_NUM, DIM), jnp.float32)

    user_idx = jax.random.randint(k_ui, (BATCH,), 0, USER_NUM, dtype=jnp.int32)
    item_idx = jax.random.randint(k_ii, (BATCH,), 0, ITEM_NUM, dtype=jnp.int32)

    fwd = jax.jit(mf_layer_forward)
    out = fwd(u_table, i_table, user_idx, item_idx)
    jax.block_until_ready(out)

    # Reference check against plain-JAX semantics of the PyTorch module.
    ref = u_table[user_idx] * i_table[item_idx]
    assert out.shape == (BATCH, DIM), out.shape
    assert jnp.allclose(out, ref, atol=1e-6, rtol=1e-6)
    print("KERNEL_OK")
</pallas_src>

<mosaic_0001>
module attributes {stable_mosaic.version = 11 : i64} {
  func.func @_mf_kernel(%arg0: i32, %arg1: memref<8xi32, #tpu.memory_space<smem>>, %arg2: memref<8xi32, #tpu.memory_space<smem>>, %arg3: memref<48x128xf32, #tpu.memory_space<vmem>>, %arg4: memref<80x128xf32, #tpu.memory_space<vmem>>, %arg5: memref<8x128xf32, #tpu.memory_space<vmem>>) attributes {dimension_semantics = [#tpu.dimension_semantics<arbitrary>], iteration_bounds = array<i64: 1>, scalar_prefetch = 2 : i64, scratch_operands = 0 : i64, tpu.core_type = #tpu.core_type<tc>, window_params = [{pipeline_mode = #tpu.pipeline_mode<synchronous>, transform_indices = @transform_0, window_bounds = array<i64: 48, 128>}, {pipeline_mode = #tpu.pipeline_mode<synchronous>, transform_indices = @transform_1, window_bounds = array<i64: 80, 128>}, {pipeline_mode = #tpu.pipeline_mode<synchronous>, transform_indices = @transform_2, window_bounds = array<i64: 8, 128>}]} {
    %c0 = arith.constant 0 : index
    %0 = memref.load %arg1[%c0] : memref<8xi32, #tpu.memory_space<smem>>
    %1 = arith.index_cast %0 : i32 to index
    %c0_0 = arith.constant 0 : index
    %2 = vector.load %arg3[%1, %c0_0] : memref<48x128xf32, #tpu.memory_space<vmem>>, vector<1x128xf32>
    %c0_1 = arith.constant 0 : index
    %3 = memref.load %arg2[%c0_1] : memref<8xi32, #tpu.memory_space<smem>>
    %4 = arith.index_cast %3 : i32 to index
    %c0_2 = arith.constant 0 : index
    %5 = vector.load %arg4[%4, %c0_2] : memref<80x128xf32, #tpu.memory_space<vmem>>, vector<1x128xf32>
    %6 = arith.mulf %2, %5 : vector<1x128xf32>
    %c1 = arith.constant 1 : index
    %7 = memref.load %arg1[%c1] : memref<8xi32, #tpu.memory_space<smem>>
    %8 = arith.index_cast %7 : i32 to index
    %c0_3 = arith.constant 0 : index
    %9 = vector.load %arg3[%8, %c0_3] : memref<48x128xf32, #tpu.memory_space<vmem>>, vector<1x128xf32>
    %c1_4 = arith.constant 1 : index
    %10 = memref.load %arg2[%c1_4] : memref<8xi32, #tpu.memory_space<smem>>
    %11 = arith.index_cast %10 : i32 to index
    %c0_5 = arith.constant 0 : index
    %12 = vector.load %arg4[%11, %c0_5] : memref<80x128xf32, #tpu.memory_space<vmem>>, vector<1x128xf32>
    %13 = arith.mulf %9, %12 : vector<1x128xf32>
    %c2 = arith.constant 2 : index
    %14 = memref.load %arg1[%c2] : memref<8xi32, #tpu.memory_space<smem>>
    %15 = arith.index_cast %14 : i32 to index
    %c0_6 = arith.constant 0 : index
    %16 = vector.load %arg3[%15, %c0_6] : memref<48x128xf32, #tpu.memory_space<vmem>>, vector<1x128xf32>
    %c2_7 = arith.constant 2 : index
    %17 = memref.load %arg2[%c2_7] : memref<8xi32, #tpu.memory_space<smem>>
    %18 = arith.index_cast %17 : i32 to index
    %c0_8 = arith.constant 0 : index
    %19 = vector.load %arg4[%18, %c0_8] : memref<80x128xf32, #tpu.memory_space<vmem>>, vector<1x128xf32>
    %20 = arith.mulf %16, %19 : vector<1x128xf32>
    %c3 = arith.constant 3 : index
    %21 = memref.load %arg1[%c3] : memref<8xi32, #tpu.memory_space<smem>>
    %22 = arith.index_cast %21 : i32 to index
    %c0_9 = arith.constant 0 : index
    %23 = vector.load %arg3[%22, %c0_9] : memref<48x128xf32, #tpu.memory_space<vmem>>, vector<1x128xf32>
    %c3_10 = arith.constant 3 : index
    %24 = memref.load %arg2[%c3_10] : memref<8xi32, #tpu.memory_space<smem>>
    %25 = arith.index_cast %24 : i32 to index
    %c0_11 = arith.constant 0 : index
    %26 = vector.load %arg4[%25, %c0_11] : memref<80x128xf32, #tpu.memory_space<vmem>>, vector<1x128xf32>
    %27 = arith.mulf %23, %26 : vector<1x128xf32>
    %c4 = arith.constant 4 : index
    %28 = memref.load %arg1[%c4] : memref<8xi32, #tpu.memory_space<smem>>
    %29 = arith.index_cast %28 : i32 to index
    %c0_12 = arith.constant 0 : index
    %30 = vector.load %arg3[%29, %c0_12] : memref<48x128xf32, #tpu.memory_space<vmem>>, vector<1x128xf32>
    %c4_13 = arith.constant 4 : index
    %31 = memref.load %arg2[%c4_13] : memref<8xi32, #tpu.memory_space<smem>>
    %32 = arith.index_cast %31 : i32 to index
    %c0_14 = arith.constant 0 : index
    %33 = vector.load %arg4[%32, %c0_14] : memref<80x128xf32, #tpu.memory_space<vmem>>, vector<1x128xf32>
    %34 = arith.mulf %30, %33 : vector<1x128xf32>
    %c5 = arith.constant 5 : index
    %35 = memref.load %arg1[%c5] : memref<8xi32, #tpu.memory_space<smem>>
    %36 = arith.index_cast %35 : i32 to index
    %c0_15 = arith.constant 0 : index
    %37 = vector.load %arg3[%36, %c0_15] : memref<48x128xf32, #tpu.memory_space<vmem>>, vector<1x128xf32>
    %c5_16 = arith.constant 5 : index
    %38 = memref.load %arg2[%c5_16] : memref<8xi32, #tpu.memory_space<smem>>
    %39 = arith.index_cast %38 : i32 to index
    %c0_17 = arith.constant 0 : index
    %40 = vector.load %arg4[%39, %c0_17] : memref<80x128xf32, #tpu.memory_space<vmem>>, vector<1x128xf32>
    %41 = arith.mulf %37, %40 : vector<1x128xf32>
    %c6 = arith.constant 6 : index
    %42 = memref.load %arg1[%c6] : memref<8xi32, #tpu.memory_space<smem>>
    %43 = arith.index_cast %42 : i32 to index
    %c0_18 = arith.constant 0 : index
    %44 = vector.load %arg3[%43, %c0_18] : memref<48x128xf32, #tpu.memory_space<vmem>>, vector<1x128xf32>
    %c6_19 = arith.constant 6 : index
    %45 = memref.load %arg2[%c6_19] : memref<8xi32, #tpu.memory_space<smem>>
    %46 = arith.index_cast %45 : i32 to index
    %c0_20 = arith.constant 0 : index
    %47 = vector.load %arg4[%46, %c0_20] : memref<80x128xf32, #tpu.memory_space<vmem>>, vector<1x128xf32>
    %48 = arith.mulf %44, %47 : vector<1x128xf32>
    %c7 = arith.constant 7 : index
    %49 = memref.load %arg1[%c7] : memref<8xi32, #tpu.memory_space<smem>>
    %50 = arith.index_cast %49 : i32 to index
    %c0_21 = arith.constant 0 : index
    %51 = vector.load %arg3[%50, %c0_21] : memref<48x128xf32, #tpu.memory_space<vmem>>, vector<1x128xf32>
    %c7_22 = arith.constant 7 : index
    %52 = memref.load %arg2[%c7_22] : memref<8xi32, #tpu.memory_space<smem>>
    %53 = arith.index_cast %52 : i32 to index
    %c0_23 = arith.constant 0 : index
    %54 = vector.load %arg4[%53, %c0_23] : memref<80x128xf32, #tpu.memory_space<vmem>>, vector<1x128xf32>
    %55 = arith.mulf %51, %54 : vector<1x128xf32>
    %56 = tpu.concatenate %6, %13, %20, %27, %34, %41, %48, %55 in 0 : vector<1x128xf32>, vector<1x128xf32>, vector<1x128xf32>, vector<1x128xf32>, vector<1x128xf32>, vector<1x128xf32>, vector<1x128xf32>, vector<1x128xf32> -> vector<8x128xf32>
    %c0_24 = arith.constant 0 : index
    %c0_25 = arith.constant 0 : index
    %57 = vector.load %arg5[%c0_24, %c0_25] : memref<8x128xf32, #tpu.memory_space<vmem>>, vector<8x128xf32>
    tpu.vector_store %arg5[%c0_24, %c0_25], %56 {strides = array<i32>} : memref<8x128xf32, #tpu.memory_space<vmem>>, vector<8x128xf32>,
    return
  }
  func.func @transform_0(%arg0: i32, %arg1: memref<8xi32, #tpu.memory_space<smem>>, %arg2: memref<8xi32, #tpu.memory_space<smem>>) -> (i32, i32) {
    %c0_i32 = arith.constant 0 : i32
    %c0_i32_0 = arith.constant 0 : i32
    %c0_i32_1 = arith.constant 0 : i32
    return %c0_i32, %c0_i32_0 : i32, i32
  }
  func.func @transform_1(%arg0: i32, %arg1: memref<8xi32, #tpu.memory_space<smem>>, %arg2: memref<8xi32, #tpu.memory_space<smem>>) -> (i32, i32) {
    %c0_i32 = arith.constant 0 : i32
    %c0_i32_0 = arith.constant 0 : i32
    %c0_i32_1 = arith.constant 0 : i32
    return %c0_i32, %c0_i32_0 : i32, i32
  }
  func.func @transform_2(%arg0: i32, %arg1: memref<8xi32, #tpu.memory_space<smem>>, %arg2: memref<8xi32, #tpu.memory_space<smem>>) -> (i32, i32) {
    %c0_i32 = arith.constant 0 : i32
    %c0_i32_0 = arith.constant 0 : i32
    %c0_i32_1 = arith.constant 0 : i32
    return %c0_i32, %c0_i32_0 : i32, i32
  }
}

</mosaic_0001>

<llo_original>
// kernel: mf_layer_forward.1
$region0: #{mf_layer_forward.1}
  #allocation0 [shape = 'u32[]', space=smem, size = 0x4, offset = 0x4, fixed_abs, tag = 'smem constant byte address 0x4 - core index']
  #allocation1 [shape = 'u32[144,128]{1,0:T(1,128)}', space=vmem, size = 0x12000, scoped, tag = 'internal scratch']
  #allocation2 [shape = 's32[1]{0}', space=sflag, size = 0x4, scoped, tag = 'scoped memory for mf_layer_forward.1']
  #allocation3 [shape = 'u8[512]{0}', space=smem, size = 0x200, scoped, tag = 'prefetched SMEM operand 0']
  #allocation4 [shape = 'u8[512]{0}', space=smem, size = 0x200, scoped, tag = 'prefetched SMEM operand 1']
  %s0 = inlined_call_operand.vmem [shape: s32[8], index: 0, kind: input, shape index: {}]
  %s1 = inlined_call_operand.vmem [shape: s32[8], index: 1, kind: input, shape index: {}]
  %s2 = inlined_call_operand.hbm [shape: f32[48,128], index: 2, kind: input, shape index: {}]
  %s3 = inlined_call_operand.hbm [shape: f32[80,128], index: 3, kind: input, shape index: {}]
  %s4 = inlined_call_operand.hbm [shape: f32[8,128], index: 4, kind: output, shape index: {}]
  %s5 = sld [smem:[#allocation0]]
  $region26: #{mf_layer_forward.1} parent=0
    _
  %s7 = ssub.s32 1, %s5
  %s8 = scalar_select 0, %s7, %s5
  %s9 = sshll.u32 %s0, 4
  %s10 = int_to_ptr.vmem [resolvable:$true] %s9
  %12 = dma.vmem_to_smem %s10, 16, [#allocation3], [#allocation2]
  %s13 = sshll.u32 %s1, 4
  %s14 = int_to_ptr.vmem [resolvable:$true] %s13
  %16 = dma.vmem_to_smem %s14, 16, [#allocation4], [#allocation2]
  %17 = dma.done [#allocation2], 32
  %18 = sfence
  $region1: #{mf_layer_forward.1} parent=0
    #allocation5 [shape = 'u8[24576]{0}', space=vmem, size = 0x6000, scoped, tag = 'input window, operand 2, single buffered']
    #allocation6 [shape = 's32[1]{0}', space=sflag, size = 0x4, scoped, tag = 'scoped memory for mf_layer_forward.1']
    #allocation7 [shape = 's32[1]{0}', space=sflag, size = 0x4, scoped, tag = 'scoped memory for mf_layer_forward.1']
    #allocation8 [shape = 'u8[40960]{0}', space=vmem, size = 0xa000, scoped, tag = 'input window, operand 3, single buffered']
    #allocation9 [shape = 's32[1]{0}', space=sflag, size = 0x4, scoped, tag = 'scoped memory for mf_layer_forward.1']
    #allocation10 [shape = 'u8[4096]{0}', space=vmem, size = 0x1000, scoped, tag = 'output window, operand 0, single buffered']
    %19 = vsyncpa [#allocation6], 0
    %20 = vsyncpa [#allocation9], 0
    %21 = vsyncpa [#allocation7], 0
    // Predicated region
    $region2: #{mf_layer_forward.1} parent=1 // pred_check
      _
    $region3: #{mf_layer_forward.1} parent=1 // pred_check_branch
      %23 = sbr.rel (0) target = $region5
    $region4: #{mf_layer_forward.1} parent=1 // pred_region
      %s25 = ssub.s32 768, 768
      %26 = vsyncadd [#allocation6], %s25
      %s27 = sshll.u32 [#allocation5], 4
      %s28 = int_to_ptr.vmem [resolvable:$true] %s27
      %33 = dma.hbm_to_vmem [thread:$0]  %s2, 768, %s28, [#allocation6], 128, 128, 8
    $region5: #{mf_layer_forward.1} parent=1 // pred_fallthru
      _
    // Predicated region
    $region6: #{mf_layer_forward.1} parent=1 // pred_check
      _
    $region7: #{mf_layer_forward.1} parent=1 // pred_check_branch
      %35 = sbr.rel (0) target = $region9
    $region8: #{mf_layer_forward.1} parent=1 // pred_region
      %s37 = ssub.s32 1280, 1280
      %38 = vsyncadd [#allocation9], %s37
      %s39 = sshll.u32 [#allocation8], 4
      %s40 = int_to_ptr.vmem [resolvable:$true] %s39
      %45 = dma.hbm_to_vmem [thread:$0]  %s3, 1280, %s40, [#allocation9], 128, 128, 8
    $region9: #{mf_layer_forward.1} parent=1 // pred_fallthru
      _
    // Predicated region
    $region10: #{mf_layer_forward.1} parent=1 // pred_check
      _
    $region11: #{mf_layer_forward.1} parent=1 // pred_check_branch
      %47 = sbr.rel (0) target = $region13
    $region12: #{mf_layer_forward.1} parent=1 // pred_region
      %48 = dma.done [#allocation6], 768
    $region13: #{mf_layer_forward.1} parent=1 // pred_fallthru
      _
    // Predicated region
    $region14: #{mf_layer_forward.1} parent=1 // pred_check
      _
    $region15: #{mf_layer_forward.1} parent=1 // pred_check_branch
      %50 = sbr.rel (0) target = $region17
    $region16: #{mf_layer_forward.1} parent=1 // pred_region
      %51 = dma.done [#allocation9], 1280
    $region17: #{mf_layer_forward.1} parent=1 // pred_fallthru
      _
    %s52 = sld [smem:[#allocation3]]
    %s53 = scalar_lea.vmem [#allocation5], %s52
    %v54 = vld [vmem:[%s53] sm:$0x1]
    %s55 = sld [smem:[#allocation4]]
    %s56 = scalar_lea.vmem [#allocation8], %s55
    %v57 = vld [vmem:[%s56] sm:$0x1]
    %v58 = vmul.f32 %v54, %v57
    %s59 = sld [smem:[#allocation3 + $0x1]]
    %s60 = scalar_lea.vmem [#allocation5], %s59
    %v61 = vld [vmem:[%s60] sm:$0x1]
    %s62 = sld [smem:[#allocation4 + $0x1]]
    %s63 = scalar_lea.vmem [#allocation8], %s62
    %v64 = vld [vmem:[%s63] sm:$0x1]
    %v65 = vmul.f32 %v61, %v64
    %s66 = sld [smem:[#allocation3 + $0x2]]
    %s67 = scalar_lea.vmem [#allocation5], %s66
    %v68 = vld [vmem:[%s67] sm:$0x1]
    %s69 = sld [smem:[#allocation4 + $0x2]]
    %s70 = scalar_lea.vmem [#allocation8], %s69
    %v71 = vld [vmem:[%s70] sm:$0x1]
    %v72 = vmul.f32 %v68, %v71
    %s73 = sld [smem:[#allocation3 + $0x3]]
    %s74 = scalar_lea.vmem [#allocation5], %s73
    %v75 = vld [vmem:[%s74] sm:$0x1]
    %s76 = sld [smem:[#allocation4 + $0x3]]
    %s77 = scalar_lea.vmem [#allocation8], %s76
    %v78 = vld [vmem:[%s77] sm:$0x1]
    %v79 = vmul.f32 %v75, %v78
    %s80 = sld [smem:[#allocation3 + $0x4]]
    %s81 = scalar_lea.vmem [#allocation5], %s80
    %v82 = vld [vmem:[%s81] sm:$0x1]
    %s83 = sld [smem:[#allocation4 + $0x4]]
    %s84 = scalar_lea.vmem [#allocation8], %s83
    %v85 = vld [vmem:[%s84] sm:$0x1]
    %v86 = vmul.f32 %v82, %v85
    %s87 = sld [smem:[#allocation3 + $0x5]]
    %s88 = scalar_lea.vmem [#allocation5], %s87
    %v89 = vld [vmem:[%s88] sm:$0x1]
    %s90 = sld [smem:[#allocation4 + $0x5]]
    %s91 = scalar_lea.vmem [#allocation8], %s90
    %v92 = vld [vmem:[%s91] sm:$0x1]
    %v93 = vmul.f32 %v89, %v92
    %s94 = sld [smem:[#allocation3 + $0x6]]
    %s95 = scalar_lea.vmem [#allocation5], %s94
    %v96 = vld [vmem:[%s95] sm:$0x1]
    %s97 = sld [smem:[#allocation4 + $0x6]]
    %s98 = scalar_lea.vmem [#allocation8], %s97
    %v99 = vld [vmem:[%s98] sm:$0x1]
    %v100 = vmul.f32 %v96, %v99
    %s101 = sld [smem:[#allocation3 + $0x7]]
    %s102 = scalar_lea.vmem [#allocation5], %s101
    %v103 = vld [vmem:[%s102] sm:$0x1]
    %s104 = sld [smem:[#allocation4 + $0x7]]
    %s105 = scalar_lea.vmem [#allocation8], %s104
    %v106 = vld [vmem:[%s105] sm:$0x1]
    %v107 = vmul.f32 %v103, %v106
    %v109 = vrot.slane %v65, 7
    %v112 = vrot.slane %v72, 6
    %v115 = vrot.slane %v79, 5
    %v118 = vrot.slane %v86, 4
    %v121 = vrot.slane %v93, 3
    %v124 = vrot.slane %v100, 2
    %v127 = vrot.slane %v107, 1
    %vm129 = vcmask 1040384
    %v130 = vsel %vm129, %v58, %v109
    %vm131 = vcmask 1041408
    %v132 = vsel %vm131, %v130, %v112
    %vm133 = vcmask 1042432
    %v134 = vsel %vm133, %v132, %v115
    %vm135 = vcmask 1043456
    %v136 = vsel %vm135, %v134, %v118
    %vm137 = vcmask 1044480
    %v138 = vsel %vm137, %v136, %v121
    %vm139 = vcmask 1045504
    %v140 = vsel %vm139, %v138, %v124
    %vm141 = vcmask 1046528
    %v142 = vsel %vm141, %v140, %v127
    %143 = vst [vmem:[#allocation10] sm:$0xff] %v142
    // Predicated region
    $region18: #{mf_layer_forward.1} parent=1 // pred_check
      _
    $region19: #{mf_layer_forward.1} parent=1 // pred_check_branch
      %145 = sbr.rel (0) target = $region21
    $region20: #{mf_layer_forward.1} parent=1 // pred_region
      %s147 = ssub.s32 128, 128
      %148 = vsyncadd [#allocation7], %s147
      %s150 = sshll.u32 [#allocation10], 4
      %s151 = int_to_ptr.vmem [resolvable:$true] %s150
      %153 = dma.vmem_to_hbm [thread:$0]  %s151, 128, %s4, [#allocation7]
    $region21: #{mf_layer_forward.1} parent=1 // pred_fallthru
      _
    // Predicated region
    $region22: #{mf_layer_forward.1} parent=1 // pred_check
      _
    $region23: #{mf_layer_forward.1} parent=1 // pred_check_branch
      %155 = sbr.rel (0) target = $region25
    $region24: #{mf_layer_forward.1} parent=1 // pred_region
      %156 = dma.done [#allocation7], 128
    $region25: #{mf_layer_forward.1} parent=1 // pred_fallthru
      _
    %157 = vsyncpa [#allocation6], 1
    %158 = vsyncpa [#allocation9], 1
    %159 = vsyncpa [#allocation7], 1

</llo_original>
